<compile_context>
chip_gen: v5e
topology: v5e:2x2
jax: 0.10.0
libtpu: 0.0.40
codegen_flags: <defaults>
</compile_context>

<pallas_src>
import math

import jax
import jax.numpy as jnp
from jax.experimental import pallas as pl
from jax.experimental.pallas import tpu as pltpu


# --------------------------------------------------------------------------
# Kernels: x_ref (TT, L) in x.dtype; mean_ref / istd_ref (1, L) in float32.
# --------------------------------------------------------------------------
def _cmvn_norm_var_kernel(x_ref, mean_ref, istd_ref, o_ref):
    xf = x_ref[...].astype(jnp.float32)
    o_ref[...] = ((xf - mean_ref[...]) * istd_ref[...]).astype(o_ref.dtype)


def _cmvn_no_var_kernel(x_ref, mean_ref, o_ref):
    xf = x_ref[...].astype(jnp.float32)
    o_ref[...] = (xf - mean_ref[...]).astype(o_ref.dtype)


# --------------------------------------------------------------------------
# Tiling helpers
# --------------------------------------------------------------------------
def _sublane_multiple(dtype) -> int:
    """Minimum sublane granularity for a dtype (8 for f32, 16 for bf16, ...)."""
    bits = jnp.dtype(dtype).itemsize * 8
    return max(8, 256 // bits)


def _choose_tile_rows(n_rows: int, lane: int, dtype, target_bytes: int) -> int:
    """Pick a row-tile size of ~target_bytes, sublane-aligned, with at least
    two grid steps when the row count permits (v7x has 2 TensorCores)."""
    mult = _sublane_multiple(dtype)
    if n_rows <= mult:
        return n_rows                           # full-extent block: always legal
    bytes_per_row = lane * jnp.dtype(dtype).itemsize
    tt = (target_bytes // bytes_per_row) // mult * mult
    tt = max(mult, tt)
    # Cap at ceil(rows/2) rounded up to the sublane multiple -> >= 2 grid steps.
    half = ((-(-n_rows // 2)) + mult - 1) // mult * mult
    return min(tt, half)


# --------------------------------------------------------------------------
# Wrapper
# --------------------------------------------------------------------------
def global_cmvn(x: jax.Array, mean: jax.Array, istd: jax.Array,
                norm_var: bool = True, *,
                tile_target_bytes: int = 4 * 1024 * 1024) -> jax.Array:
    """Pallas implementation of GlobalCMVN.forward.

    Args:
      x:    (B, T, D) features.
      mean: (D,) mean stats.
      istd: (D,) inverse std (1.0 / std).
      norm_var: whether to multiply by istd (static Python bool).
      tile_target_bytes: approximate per-tile VMEM footprint (test knob).
    Returns:
      (B, T, D) normalized features, same dtype as x.
    """
    B, T, D = x.shape
    assert mean.shape == (D,) and istd.shape == (D,)

    N = B * T
    mean_f = mean.astype(jnp.float32)
    istd_f = istd.astype(jnp.float32)

    # lane = lcm(D, 128): lane-dense and a whole number of feature rows.
    g = math.gcd(D, 128)
    fold = 128 // g
    lane = D * fold

    # Row-axis padding (at most fold-1 dummy rows) when N % fold != 0.
    pad_rows = (-N) % fold
    if pad_rows:
        x2 = jnp.pad(x.reshape(N, D), ((0, pad_rows), (0, 0)))
    else:
        x2 = x
    n_pad = N + pad_rows
    rows = n_pad // fold
    xk = x2.reshape(rows, lane)                 # zero-copy when pad_rows == 0

    if fold > 1:
        mean_row = jnp.tile(mean_f, fold).reshape(1, lane)
        istd_row = jnp.tile(istd_f, fold).reshape(1, lane)
    else:
        mean_row = mean_f.reshape(1, lane)
        istd_row = istd_f.reshape(1, lane)

    tt = _choose_tile_rows(rows, lane, x.dtype, tile_target_bytes)
    grid = (pl.cdiv(rows, tt),)

    x_spec = pl.BlockSpec((tt, lane), lambda i: (i, 0))
    vec_spec = pl.BlockSpec((1, lane), lambda i: (0, 0))   # resident stats row
    out_spec = pl.BlockSpec((tt, lane), lambda i: (i, 0))

    if norm_var:
        kernel = _cmvn_norm_var_kernel
        in_specs = [x_spec, vec_spec, vec_spec]
        args = (xk, mean_row, istd_row)
    else:
        kernel = _cmvn_no_var_kernel
        in_specs = [x_spec, vec_spec]
        args = (xk, mean_row)

    out = pl.pallas_call(
        kernel,
        out_shape=jax.ShapeDtypeStruct((rows, lane), x.dtype),
        grid_spec=pltpu.PrefetchScalarGridSpec(
            num_scalar_prefetch=0,
            grid=grid,
            in_specs=in_specs,
            out_specs=out_spec,
        ),
        compiler_params=pltpu.CompilerParams(
            dimension_semantics=("parallel",),
            # 4 MiB tiles x (2 in + 2 out buffers) = 16 MiB, which is exactly
            # v5e's scoped-VMEM default; raise explicitly (safe on all gens).
            vmem_limit_bytes=32 * 1024 * 1024,
        ),
    )(*args)

    if pad_rows:
        out = out.reshape(n_pad, D)[:N]
    return out.reshape(B, T, D)


# --------------------------------------------------------------------------
# Self-test
# --------------------------------------------------------------------------
if __name__ == "__main__":
    key = jax.random.PRNGKey(0)

    def ref_cmvn(x, mean, istd, norm_var=True):
        y = x.astype(jnp.float32) - mean[None, None, :].astype(jnp.float32)
        if norm_var:
            y = y * istd[None, None, :].astype(jnp.float32)
        return y.astype(x.dtype)

    def run_case(B, T, D, norm_var, tile_target_bytes=4 * 1024 * 1024):
        k = jax.random.fold_in(key, B * 100000 + T * 1000 + D)
        kx, km, ks = jax.random.split(k, 3)
        x = jax.random.normal(kx, (B, T, D), dtype=jnp.float32)
        mean = jax.random.normal(km, (D,), dtype=jnp.float32)
        istd = 1.0 / (0.5 + jax.nn.softplus(
            jax.random.normal(ks, (D,), dtype=jnp.float32)))
        out = global_cmvn(x, mean, istd, norm_var=norm_var,
                          tile_target_bytes=tile_target_bytes)
        jax.block_until_ready(out)
        ref = ref_cmvn(x, mean, istd, norm_var=norm_var)
        assert out.shape == x.shape and out.dtype == x.dtype
        assert jnp.allclose(out, ref, atol=1e-6, rtol=1e-6), \
            f"mismatch for shape {(B, T, D)} norm_var={norm_var}"

    # Primary shape matching the module's (batch, max_len, feat_dim).
    run_case(2, 8, 32, norm_var=True)      # fold=4, zero-copy reshape
    run_case(2, 8, 32, norm_var=False)     # no-var kernel
    run_case(2, 4, 128, norm_var=True)     # lane-dense already (fold=1)
    run_case(2, 8, 40, norm_var=True)      # lane = lcm(40,128) = 640, fold=16
    run_case(1, 5, 32, norm_var=True)      # N % fold != 0 -> 3 padded rows
    # Multi-step grid with a ragged last block (tiny tile target forces it).
    run_case(1, 20, 128, norm_var=True, tile_target_bytes=4096)

    print("KERNEL_OK")
</pallas_src>

<mosaic_0001>
module attributes {stable_mosaic.version = 11 : i64} {
  func.func @_cmvn_norm_var_kernel(%arg0: i32, %arg1: memref<4x128xf32, #tpu.memory_space<vmem>>, %arg2: memref<1x128xf32, #tpu.memory_space<vmem>>, %arg3: memref<1x128xf32, #tpu.memory_space<vmem>>, %arg4: memref<4x128xf32, #tpu.memory_space<vmem>>) attributes {dimension_semantics = [#tpu.dimension_semantics<parallel>], iteration_bounds = array<i64: 1>, scalar_prefetch = 0 : i64, scratch_operands = 0 : i64, tpu.core_type = #tpu.core_type<tc>, window_params = [{transform_indices = @transform_0, window_bounds = array<i64: 4, 128>}, {pipeline_mode = #tpu.pipeline_mode<synchronous>, transform_indices = @transform_1, window_bounds = array<i64: 1, 128>}, {pipeline_mode = #tpu.pipeline_mode<synchronous>, transform_indices = @transform_2, window_bounds = array<i64: 1, 128>}, {transform_indices = @transform_3, window_bounds = array<i64: 4, 128>}]} {
    %c0 = arith.constant 0 : index
    %c0_0 = arith.constant 0 : index
    %0 = vector.load %arg1[%c0, %c0_0] : memref<4x128xf32, #tpu.memory_space<vmem>>, vector<4x128xf32>
    %c0_1 = arith.constant 0 : index
    %c0_2 = arith.constant 0 : index
    %1 = vector.load %arg2[%c0_1, %c0_2] : memref<1x128xf32, #tpu.memory_space<vmem>>, vector<1x128xf32>
    %2 = vector.broadcast %1 : vector<1x128xf32> to vector<4x128xf32>
    %3 = arith.subf %0, %2 : vector<4x128xf32>
    %c0_3 = arith.constant 0 : index
    %c0_4 = arith.constant 0 : index
    %4 = vector.load %arg3[%c0_3, %c0_4] : memref<1x128xf32, #tpu.memory_space<vmem>>, vector<1x128xf32>
    %5 = vector.broadcast %4 : vector<1x128xf32> to vector<4x128xf32>
    %6 = arith.mulf %3, %5 : vector<4x128xf32>
    %c0_5 = arith.constant 0 : index
    %c0_6 = arith.constant 0 : index
    %7 = vector.load %arg4[%c0_5, %c0_6] : memref<4x128xf32, #tpu.memory_space<vmem>>, vector<4x128xf32>
    tpu.vector_store %arg4[%c0_5, %c0_6], %6 {strides = array<i32>} : memref<4x128xf32, #tpu.memory_space<vmem>>, vector<4x128xf32>,
    return
  }
  func.func @transform_0(%arg0: i32) -> (i32, i32) {
    %c0_i32 = arith.constant 0 : i32
    %c0_i32_0 = arith.constant 0 : i32
    return %arg0, %c0_i32 : i32, i32
  }
  func.func @transform_1(%arg0: i32) -> (i32, i32) {
    %c0_i32 = arith.constant 0 : i32
    %c0_i32_0 = arith.constant 0 : i32
    %c0_i32_1 = arith.constant 0 : i32
    return %c0_i32, %c0_i32_0 : i32, i32
  }
  func.func @transform_2(%arg0: i32) -> (i32, i32) {
    %c0_i32 = arith.constant 0 : i32
    %c0_i32_0 = arith.constant 0 : i32
    %c0_i32_1 = arith.constant 0 : i32
    return %c0_i32, %c0_i32_0 : i32, i32
  }
  func.func @transform_3(%arg0: i32) -> (i32, i32) {
    %c0_i32 = arith.constant 0 : i32
    %c0_i32_0 = arith.constant 0 : i32
    return %arg0, %c0_i32 : i32, i32
  }
}

</mosaic_0001>

<llo_original>
// kernel: tpu_custom_call.1
$region0: #{tpu_custom_call.1}
  #allocation0 [shape = 'u32[]', space=smem, size = 0x4, offset = 0x4, fixed_abs, tag = 'smem constant byte address 0x4 - core index']
  #allocation1 [shape = 'u32[72,128]{1,0:T(1,128)}', space=vmem, size = 0x9000, scoped, tag = 'internal scratch']
  %s0 = inlined_call_operand.hbm [shape: f32[4,128], index: 0, kind: input, shape index: {}]
  %s1 = inlined_call_operand.hbm [shape: f32[1,128], index: 1, kind: input, shape index: {}]
  %s2 = inlined_call_operand.vmem [shape: f32[1,128], index: 2, kind: input, shape index: {}]
  %s3 = inlined_call_operand.hbm [shape: f32[4,128], index: 3, kind: output, shape index: {}]
  %s4 = sld [smem:[#allocation0]]
  $region30: #{tpu_custom_call.1} parent=0
    _
  %s6 = ssub.s32 1, %s4
  %s7 = scalar_select 0, %s6, %s4
  $region1: #{tpu_custom_call.1} parent=0
    #allocation2 [shape = 'u8[2048]{0}', space=vmem, size = 0x800, scoped, tag = 'input window, operand 0, single buffered']
    #allocation3 [shape = 's32[1]{0}', space=sflag, size = 0x4, scoped, tag = 'scoped memory for tpu_custom_call.1']
    #allocation4 [shape = 's32[1]{0}', space=sflag, size = 0x4, scoped, tag = 'scoped memory for tpu_custom_call.1']
    #allocation5 [shape = 'u8[512]{0}', space=vmem, size = 0x400, scoped, tag = 'input window, operand 1, single buffered']
    #allocation6 [shape = 's32[1]{0}', space=sflag, size = 0x4, scoped, tag = 'scoped memory for tpu_custom_call.1']
    #allocation7 [shape = 'u8[2048]{0}', space=vmem, size = 0x800, scoped, tag = 'output window, operand 0, single buffered']
    %8 = vsyncpa [#allocation3], 0
    %9 = vsyncpa [#allocation6], 0
    %10 = vsyncpa [#allocation4], 0
    // Predicated region
    $region2: #{tpu_custom_call.1} parent=1 // pred_check
      _
    $region3: #{tpu_custom_call.1} parent=1 // pred_check_branch
      %12 = sbr.rel (0) target = $region5
    $region4: #{tpu_custom_call.1} parent=1 // pred_region
      %14 = vsyncadd [#allocation3], 0
      %s16 = sshll.u32 %s0, 4
      %s17 = int_to_ptr.hbm [resolvable:$true] %s16
      %s18 = sshll.u32 [#allocation2], 4
      %s19 = int_to_ptr.vmem [resolvable:$true] %s18
      %21 = dma.hbm_to_vmem [thread:$0]  %s17, 64, %s19, [#allocation3]
    $region5: #{tpu_custom_call.1} parent=1 // pred_fallthru
      _
    // Predicated region
    $region6: #{tpu_custom_call.1} parent=1 // pred_check
      _
    $region7: #{tpu_custom_call.1} parent=1 // pred_check_branch
      %23 = sbr.rel (0) target = $region9
    $region8: #{tpu_custom_call.1} parent=1 // pred_region
      %25 = vsyncadd [#allocation6], 0
      %s27 = sshll.u32 %s1, 4
      %s28 = int_to_ptr.hbm [resolvable:$true] %s27
      %s29 = sshll.u32 [#allocation5], 4
      %s30 = int_to_ptr.vmem [resolvable:$true] %s29
      %32 = dma.hbm_to_vmem [thread:$0]  %s28, 16, %s30, [#allocation6]
    $region9: #{tpu_custom_call.1} parent=1 // pred_fallthru
      _
    // Predicated region
    $region10: #{tpu_custom_call.1} parent=1 // pred_check
      _
    $region11: #{tpu_custom_call.1} parent=1 // pred_check_branch
      %34 = sbr.rel (0) target = $region13
    $region12: #{tpu_custom_call.1} parent=1 // pred_region
      _
    $region13: #{tpu_custom_call.1} parent=1 // pred_fallthru
      _
    // Predicated region
    $region14: #{tpu_custom_call.1} parent=1 // pred_check
      _
    $region15: #{tpu_custom_call.1} parent=1 // pred_check_branch
      %36 = sbr.rel (0) target = $region17
    $region16: #{tpu_custom_call.1} parent=1 // pred_region
      %38 = dma.done [#allocation3], 64
    $region17: #{tpu_custom_call.1} parent=1 // pred_fallthru
      _
    // Predicated region
    $region18: #{tpu_custom_call.1} parent=1 // pred_check
      _
    $region19: #{tpu_custom_call.1} parent=1 // pred_check_branch
      %40 = sbr.rel (0) target = $region21
    $region20: #{tpu_custom_call.1} parent=1 // pred_region
      %42 = dma.done [#allocation6], 16
    $region21: #{tpu_custom_call.1} parent=1 // pred_fallthru
      _
    %v43 = vld [vmem:[#allocation2] sm:$0xf]
    %v44 = vld [vmem:[#allocation5] sm:$0x1]
    %v46 = vperm.slane %v44, 0
    %v48 = vsub.f32 %v43, %v46
    %v49 = vld [vmem:[%s2] sm:$0x1]
    %v51 = vperm.slane %v49, 0
    %v53 = vmul.f32 %v48, %v51
    %54 = vst [vmem:[#allocation7] sm:$0xf] %v53
    // Predicated region
    $region22: #{tpu_custom_call.1} parent=1 // pred_check
      _
    $region23: #{tpu_custom_call.1} parent=1 // pred_check_branch
      %56 = sbr.rel (0) target = $region25
    $region24: #{tpu_custom_call.1} parent=1 // pred_region
      %58 = vsyncadd [#allocation4], 0
      %s60 = sshll.u32 [#allocation7], 4
      %s61 = int_to_ptr.vmem [resolvable:$true] %s60
      %s62 = sshll.u32 %s3, 4
      %s63 = int_to_ptr.hbm [resolvable:$true] %s62
      %65 = dma.vmem_to_hbm [thread:$0]  %s61, 64, %s63, [#allocation4]
    $region25: #{tpu_custom_call.1} parent=1 // pred_fallthru
      _
    // Predicated region
    $region26: #{tpu_custom_call.1} parent=1 // pred_check
      _
    $region27: #{tpu_custom_call.1} parent=1 // pred_check_branch
      %67 = sbr.rel (0) target = $region29
    $region28: #{tpu_custom_call.1} parent=1 // pred_region
      %69 = dma.done [#allocation4], 64
    $region29: #{tpu_custom_call.1} parent=1 // pred_fallthru
      _
    %70 = vsyncpa [#allocation3], 1
    %71 = vsyncpa [#allocation6], 1
    %72 = vsyncpa [#allocation4], 1

</llo_original>
